<compile_context>
chip_gen: v7x
topology: tpu7x:2x2x1
jax: 0.10.0
libtpu: 0.0.40
codegen_flags: <defaults>
</compile_context>

<pallas_src>
import math

import jax
import jax.numpy as jnp
from jax import lax
from jax.experimental import pallas as pl
from jax.experimental.pallas import tpu as pltpu


def _round_up(x, m):
    return ((x + m - 1) // m) * m


def _pick_tile(dim, cap, align):
    """Largest multiple of `align` that divides `dim` and is <= cap.

    `dim` must itself be a multiple of `align` (so `align` is always valid).
    """
    cap = max(align, min(cap, dim))
    best = align
    t = align
    while t <= cap:
        if dim % t == 0:
            best = t
        t += align
    return best


def lrp_linear_kernel(x_ref, w_ref, b_ref, o_ref, acc_ref):
    # x_ref: (tm, tk)            -- activation tile
    # w_ref: (tn, tk)            -- weight tile in original (outp, inp) layout
    # b_ref: (1, tn)             -- bias tile
    # o_ref: (tm, tn)            -- output tile
    # acc_ref: (tm, tn) f32 VMEM scratch, persists over the K grid axis
    k = pl.program_id(2)

    @pl.when(k == 0)
    def _():
        acc_ref[...] = jnp.zeros_like(acc_ref)

    # Contract the shared 'inp' dim of x (dim 1) with the 'inp' dim of the
    # un-transposed weight (dim 1): a trans_b matmul the MXU lowers without
    # any XLU relayout, f32 accumulation.
    acc_ref[...] += lax.dot_general(
        x_ref[...],
        w_ref[...],
        dimension_numbers=(((1,), (1,)), ((), ())),
        preferred_element_type=jnp.float32,
    )

    # Bias added exactly once, on the final K step.
    @pl.when(k == pl.num_programs(2) - 1)
    def _():
        o_ref[...] = (
            acc_ref[...] + b_ref[...].astype(jnp.float32)
        ).astype(o_ref.dtype)


def lrp_linear_forward(x, weight, bias, *, tm=None, tn=None, tk=None,
                       use_pallas=None):
    """Pallas equivalent of LRP_Linear.forward (nn.Linear: x @ W^T + b).

    x:      (B, inp)
    weight: (outp, inp)   -- PyTorch nn.Linear layout (NOT transposed here)
    bias:   (outp,)
    """
    B, inp = x.shape
    outp, inp_w = weight.shape
    assert inp == inp_w, (inp, inp_w)

    # Tiny layers: padding waste plus fixed per-call/per-step overhead
    # dominates; plain XLA wins there.
    if use_pallas is None:
        use_pallas = (inp >= 128 and outp >= 128
                      and B * inp * outp >= 64 * 128 * 128)
    if not use_pallas:
        return (x @ weight.T + bias.astype(x.dtype)).astype(x.dtype)

    ITEM = jnp.dtype(x.dtype).itemsize
    VMEM_TILE_BUDGET = 40 * 1024 * 1024   # safe even under v7x's 64 MiB VMEM

    # Pad only to the hardware base tiling (8 sublanes / 128 lanes); tiles are
    # then chosen as divisors of the padded dims -> no pad-to-tile waste.
    Bp = _round_up(B, 8)
    Kp = _round_up(inp, 128)
    Np = _round_up(outp, 128)

    auto_mn = tm is None and tn is None

    if tm is None:
        # Grow tm first: with grid order (i, j, k) the weight is re-streamed
        # ceil(Bp/tm) times, so tm is the main HBM-traffic lever.
        tm = _pick_tile(Bp, 512, 8)
    else:
        Bp = _round_up(Bp, tm)
    if tn is None:
        tn = _pick_tile(Np, 512, 128)
    else:
        Np = _round_up(Np, tn)
    if tk is None:
        # Budget tk against VMEM: double-buffered x/w/bias tiles + f32 acc +
        # double-buffered output tile must fit the budget.
        fixed = 2 * tm * tn * ITEM + tm * tn * 4 + 2 * tn * ITEM
        tk_vmem_cap = max(128, (VMEM_TILE_BUDGET - fixed) // (2 * (tm + tn) * ITEM))
        tk = _pick_tile(Kp, min(2048, int(tk_vmem_cap)), 128)
    else:
        Kp = _round_up(Kp, tk)

    # Make sure there are >= 2 parallel output tiles so both TensorCores on
    # megacore parts (v7x) get work; only touch auto-picked tiles.
    if auto_mn and (Bp // tm) * (Np // tn) < 2:
        if Bp % 16 == 0 and (Bp // 2) % 8 == 0:
            tm = Bp // 2
        elif Np % 256 == 0:
            tn = Np // 2

    # Zero-pad arrays only when actually needed.  Zero K-padding contributes
    # nothing to the accumulation; padded M/N rows/cols are sliced off.
    # NOTE: in a real model the (static) padded weight/bias should be cached
    # across calls; for 128-aligned layer sizes there is no pad at all.
    x_p = x if (Bp == B and Kp == inp) else jnp.pad(x, ((0, Bp - B), (0, Kp - inp)))
    w_p = weight if (Np == outp and Kp == inp) else jnp.pad(
        weight, ((0, Np - outp), (0, Kp - inp)))
    b_p = (bias if Np == outp else jnp.pad(bias, (0, Np - outp))).reshape(1, Np)

    grid = (Bp // tm, Np // tn, Kp // tk)

    # Truthful bytes-accessed hint: x is re-streamed once per output-column
    # tile, W once per output-row tile, output written once.
    bytes_accessed = (
        Bp * Kp * ITEM * grid[1]
        + Np * Kp * ITEM * grid[0]
        + Np * ITEM
        + Bp * Np * ITEM
    )
    cost = pl.CostEstimate(
        flops=2 * B * inp * outp,
        transcendentals=0,
        bytes_accessed=int(bytes_accessed),
    )

    # VMEM limit from the actual tile footprint (double-buffered), with a
    # 32 MiB floor and a 48 MiB cap so it stays safe on v7x (64 MiB physical).
    tile_bytes = (2 * (tm * tk + tn * tk + tn) * ITEM
                  + 2 * tm * tn * ITEM
                  + tm * tn * 4)
    vmem_limit = int(min(48 * 1024 * 1024,
                         max(32 * 1024 * 1024, tile_bytes * 3 // 2)))

    out_padded = pl.pallas_call(
        lrp_linear_kernel,
        out_shape=jax.ShapeDtypeStruct((Bp, Np), x.dtype),
        grid_spec=pltpu.PrefetchScalarGridSpec(
            num_scalar_prefetch=0,
            grid=grid,
            in_specs=[
                pl.BlockSpec((tm, tk), lambda i, j, k: (i, k)),   # x tile
                pl.BlockSpec((tn, tk), lambda i, j, k: (j, k)),   # W tile (outp, inp)
                pl.BlockSpec((1, tn), lambda i, j, k: (0, j)),    # bias tile
            ],
            out_specs=pl.BlockSpec((tm, tn), lambda i, j, k: (i, j)),
            scratch_shapes=[pltpu.VMEM((tm, tn), jnp.float32)],
        ),
        compiler_params=pltpu.CompilerParams(
            dimension_semantics=("parallel", "parallel", "arbitrary"),
            vmem_limit_bytes=vmem_limit,
        ),
        cost_estimate=cost,
    )(x_p, w_p, b_p)

    if Bp == B and Np == outp:
        return out_padded
    return out_padded[:B, :outp]


def init_lrp_linear_params(key, inp, outp, dtype=jnp.float32):
    """Deterministic re-creation of LRP_Linear.__init__ parameter init.

    - weight: xavier_uniform_ with gain = calculate_gain('relu') = sqrt(2)
    - bias:   PyTorch nn.Linear default uniform(-1/sqrt(fan_in), 1/sqrt(fan_in))
    """
    kw, kb = jax.random.split(key)
    gain = math.sqrt(2.0)  # relu gain
    bound_w = gain * math.sqrt(6.0 / (inp + outp))
    weight = jax.random.uniform(
        kw, (outp, inp), dtype=dtype, minval=-bound_w, maxval=bound_w
    )
    bound_b = 1.0 / math.sqrt(inp)
    bias = jax.random.uniform(
        kb, (outp,), dtype=dtype, minval=-bound_b, maxval=bound_b
    )
    return weight, bias


if __name__ == "__main__":
    key = jax.random.PRNGKey(0)
    k_x, k_p = jax.random.split(key)

    # Moderate shapes that take the Pallas path; also exercises the
    # >=2-parallel-output-tile heuristic for megacore parts.
    batch, inp, outp = 128, 512, 256
    x = jax.random.normal(k_x, (batch, inp), dtype=jnp.float32)
    weight, bias = init_lrp_linear_params(k_p, inp, outp)
    y_ref = x @ weight.T + bias

    # Auto-tiled Pallas path.
    y = jax.block_until_ready(lrp_linear_forward(x, weight, bias))
    assert y.shape == (batch, outp)
    assert jnp.allclose(y, y_ref, atol=1e-4, rtol=1e-4)

    # Explicit small tiles -> (2, 2, 4) grid: exercises the f32 accumulator,
    # pl.when init/finalize, and bias-added-once paths.
    y2 = jax.block_until_ready(
        lrp_linear_forward(x, weight, bias, tm=64, tn=128, tk=128,
                           use_pallas=True)
    )
    assert jnp.allclose(y2, y_ref, atol=1e-4, rtol=1e-4)

    # Tiny, module-typical layer: auto-dispatches to the plain-XLA fast path
    # (padding 32->128 K and 16->128 N would only waste FLOPs/bytes).
    x_small = jax.random.normal(k_x, (8, 32), dtype=jnp.float32)
    w_small, b_small = init_lrp_linear_params(k_p, 32, 16)
    y_small = jax.block_until_ready(lrp_linear_forward(x_small, w_small, b_small))
    assert jnp.allclose(y_small, x_small @ w_small.T + b_small,
                        atol=1e-5, rtol=1e-5)

    # TODO(synk): relprop() (LRP backward relevance propagation) relies on
    # autograd over cloned/rho-modified layers and A_dict Python-side caching;
    # these are not part of the forward pass and are not implemented as kernels.
    print("KERNEL_OK")
</pallas_src>

<mosaic_0001>
module attributes {stable_mosaic.version = 11 : i64} {
  func.func @lrp_linear_kernel(%arg0: i32, %arg1: i32, %arg2: i32, %arg3: memref<64x512xf32, #tpu.memory_space<vmem>>, %arg4: memref<256x512xf32, #tpu.memory_space<vmem>>, %arg5: memref<1x256xf32, #tpu.memory_space<vmem>>, %arg6: memref<64x256xf32, #tpu.memory_space<vmem>>, %arg7: memref<64x256xf32, #tpu.memory_space<vmem>>) attributes {dimension_semantics = [#tpu.dimension_semantics<parallel>, #tpu.dimension_semantics<parallel>, #tpu.dimension_semantics<arbitrary>], iteration_bounds = array<i64: 2, 1, 1>, scalar_prefetch = 0 : i64, scratch_operands = 1 : i64, tpu.core_type = #tpu.core_type<tc>, window_params = [{transform_indices = @transform_0, window_bounds = array<i64: 64, 512>}, {transform_indices = @transform_1, window_bounds = array<i64: 256, 512>}, {transform_indices = @transform_2, window_bounds = array<i64: 1, 256>}, {transform_indices = @transform_3, window_bounds = array<i64: 64, 256>}]} {
    %c0_i32 = arith.constant 0 : i32
    %0 = arith.cmpi eq, %arg2, %c0_i32 : i32
    %1 = arith.extui %0 : i1 to i32
    %c0_i32_0 = arith.constant 0 : i32
    %2 = arith.cmpi ne, %1, %c0_i32_0 : i32
    scf.if %2 {
      %cst_10 = arith.constant 0.000000e+00 : f32
      %12 = vector.broadcast %cst_10 : f32 to vector<64x256xf32>
      %c0_11 = arith.constant 0 : index
      %c0_12 = arith.constant 0 : index
      %13 = vector.load %arg7[%c0_11, %c0_12] : memref<64x256xf32, #tpu.memory_space<vmem>>, vector<64x256xf32>
      tpu.vector_store %arg7[%c0_11, %c0_12], %12 {strides = array<i32>} : memref<64x256xf32, #tpu.memory_space<vmem>>, vector<64x256xf32>,
    } else {
    }
    %c0 = arith.constant 0 : index
    %c0_1 = arith.constant 0 : index
    %3 = vector.load %arg7[%c0, %c0_1] : memref<64x256xf32, #tpu.memory_space<vmem>>, vector<64x256xf32>
    %c0_2 = arith.constant 0 : index
    %c0_3 = arith.constant 0 : index
    %4 = vector.load %arg3[%c0_2, %c0_3] : memref<64x512xf32, #tpu.memory_space<vmem>>, vector<64x512xf32>
    %c0_4 = arith.constant 0 : index
    %c0_5 = arith.constant 0 : index
    %5 = vector.load %arg4[%c0_4, %c0_5] : memref<256x512xf32, #tpu.memory_space<vmem>>, vector<256x512xf32>
    %cst = arith.constant dense<0.000000e+00> : vector<64x256xf32>
    %6 = tpu.matmul %4, %5, %cst {dimension_numbers = #tpu.dot_dimension_numbers<[1], [1], [0], [0], [0, 0, 1, 0], [], []>} : vector<64x512xf32>, vector<256x512xf32>, vector<64x256xf32> -> vector<64x256xf32>
    %7 = arith.addf %3, %6 : vector<64x256xf32>
    %c0_6 = arith.constant 0 : index
    %c0_7 = arith.constant 0 : index
    %8 = vector.load %arg7[%c0_6, %c0_7] : memref<64x256xf32, #tpu.memory_space<vmem>>, vector<64x256xf32>
    tpu.vector_store %arg7[%c0_6, %c0_7], %7 {strides = array<i32>} : memref<64x256xf32, #tpu.memory_space<vmem>>, vector<64x256xf32>,
    %c0_i32_8 = arith.constant 0 : i32
    %9 = arith.cmpi eq, %arg2, %c0_i32_8 : i32
    %10 = arith.extui %9 : i1 to i32
    %c0_i32_9 = arith.constant 0 : i32
    %11 = arith.cmpi ne, %10, %c0_i32_9 : i32
    scf.if %11 {
      %c0_10 = arith.constant 0 : index
      %c0_11 = arith.constant 0 : index
      %12 = vector.load %arg7[%c0_10, %c0_11] : memref<64x256xf32, #tpu.memory_space<vmem>>, vector<64x256xf32>
      %c0_12 = arith.constant 0 : index
      %c0_13 = arith.constant 0 : index
      %13 = vector.load %arg5[%c0_12, %c0_13] : memref<1x256xf32, #tpu.memory_space<vmem>>, vector<1x256xf32>
      %14 = vector.broadcast %13 : vector<1x256xf32> to vector<64x256xf32>
      %15 = arith.addf %12, %14 : vector<64x256xf32>
      %c0_14 = arith.constant 0 : index
      %c0_15 = arith.constant 0 : index
      %16 = vector.load %arg6[%c0_14, %c0_15] : memref<64x256xf32, #tpu.memory_space<vmem>>, vector<64x256xf32>
      tpu.vector_store %arg6[%c0_14, %c0_15], %15 {strides = array<i32>} : memref<64x256xf32, #tpu.memory_space<vmem>>, vector<64x256xf32>,
    } else {
    }
    return
  }
  func.func @transform_0(%arg0: i32, %arg1: i32, %arg2: i32) -> (i32, i32) {
    %c0_i32 = arith.constant 0 : i32
    return %arg0, %arg2 : i32, i32
  }
  func.func @transform_1(%arg0: i32, %arg1: i32, %arg2: i32) -> (i32, i32) {
    %c0_i32 = arith.constant 0 : i32
    return %arg1, %arg2 : i32, i32
  }
  func.func @transform_2(%arg0: i32, %arg1: i32, %arg2: i32) -> (i32, i32) {
    %c0_i32 = arith.constant 0 : i32
    %c0_i32_0 = arith.constant 0 : i32
    return %c0_i32, %arg1 : i32, i32
  }
  func.func @transform_3(%arg0: i32, %arg1: i32, %arg2: i32) -> (i32, i32) {
    %c0_i32 = arith.constant 0 : i32
    return %arg0, %arg1 : i32, i32
  }
}

</mosaic_0001>

<llo_original>
// kernel: tpu_custom_call.1
$region0: #{tpu_custom_call.1}
  #allocation0 [shape = 'u32[]', space=smem, size = 0x4, offset = 0x4, fixed_abs, tag = 'smem constant byte address 0x4 - core index']
  #allocation1 [shape = 'u32[144,128]{1,0:T(1,128)}', space=vmem, size = 0x12000, scoped, tag = 'internal scratch']
  #allocation2 [shape = 'f32[64,256]{1,0:T(8,128)}', space=vmem, size = 0x10000, scoped, tag = 'scratch operand']
  %s0 = inlined_call_operand.hbm [shape: f32[128,512], index: 0, kind: input, shape index: {}]
  %s1 = inlined_call_operand.hbm [shape: f32[256,512], index: 1, kind: input, shape index: {}]
  %s2 = inlined_call_operand.vmem [shape: f32[1,256], index: 2, kind: input, shape index: {}]
  %s3 = inlined_call_operand.hbm [shape: f32[128,256], index: 3, kind: output, shape index: {}]
  %s4 = sld [smem:[#allocation0]]
  $region61: #{tpu_custom_call.1} parent=0
    _
  %s6 = ssub.s32 1, %s4
  %s7 = scalar_select 0, %s6, %s4
  $region1: #{tpu_custom_call.1} parent=0
    #allocation3 [shape = 'u8[262144]{0}', space=vmem, size = 0x40000, scoped, tag = 'input window, operand 0']
    #allocation4 [shape = 's32[2]{0}', space=sflag, size = 0x8, scoped, tag = 'scoped memory for tpu_custom_call.1']
    #allocation5 [shape = 's32[2]{0}', space=sflag, size = 0x8, scoped, tag = 'scoped memory for tpu_custom_call.1']
    #allocation6 [shape = 'u8[524288]{0}', space=vmem, size = 0x80000, scoped, tag = 'input window, operand 1, single buffered']
    #allocation7 [shape = 's32[1]{0}', space=sflag, size = 0x4, scoped, tag = 'scoped memory for tpu_custom_call.1']
    #allocation8 [shape = 'u8[131072]{0}', space=vmem, size = 0x20000, scoped, tag = 'output window, operand 0']
    %8 = vsyncpa [#allocation4], 0
    %s9 = scalar_lea.sflag [#allocation4], 1
    %10 = vsyncpa %s9, 0
    %11 = vsyncpa [#allocation7], 0
    %12 = vsyncpa [#allocation5], 0
    %s13 = scalar_lea.sflag [#allocation5], 1
    %14 = vsyncpa %s13, 0
    loop: start=0, step=1, limit=4
    $region2: #{tpu_custom_call.1} parent=1 // loop_pre_header
      _
    $region3: #{tpu_custom_call.1} parent=1 // loop_header
      %s16 = sphi 0, %s20
      %p17 = scmp.ge.s32.totalorder %s16, 4
      %s23 = sphi 0, %s42
      %s24 = sphi 0, %s38
      %s25 = sphi 0, %s34
      %s26 = sphi 0, %s23
      %s27 = sphi 0, %s24
      %s28 = sphi 0, %s25
      %s29 = sphi 0, %s26
      %s30 = sphi 0, %s27
      %s31 = sphi 0, %s28
      %s47 = sphi 0, %s49
      %s50 = sphi 0, %s47
      %s51 = sphi 0, %s50
      %s67 = sphi 0, %s51
      %s75 = sphi 0, %s77
      %s78 = sphi 0, %s75
      %s79 = sphi 0, %s78
      %s95 = sphi 0, %s79
      %s101 = sphi 0, %s103
      %s104 = sphi 0, %s101
      %s105 = sphi 0, %s104
      %s121 = sphi 0, %s105
      %s129 = sphi 0, %s131
      %s132 = sphi 0, %s129
      %s133 = sphi 0, %s132
      %s149 = sphi 0, %s133
    $region4: #{tpu_custom_call.1} parent=1 // loop_header_branch
      %19 = sbr.rel (%p17) target = $region8
    $region5: #{tpu_custom_call.1} parent=1 // loop_body
      %s21 = ssub.s32 %s16, 1
      %s22 = ssub.s32 %s16, 2
      %s32 = sadd.s32 1, %s25
      %p33 = scmp.ge.s32.totalorder %s32, 1
      %s34 = scalar_select %p33, 0, %s32
      %s35 = sadd.s32 1, %s24
      %s36 = scalar_select %p33, %s35, %s24
      %p37 = scmp.ge.s32.totalorder %s36, 1
      %s38 = scalar_select %p37, 0, %s36
      %s39 = sadd.s32 1, %s23
      %s40 = scalar_select %p37, %s39, %s23
      %p41 = scmp.ge.s32.totalorder %s40, 2
      %s42 = scalar_select %p41, 0, %s40
      %s43 = ssub.s32 %s23, %s42
      %s44 = ssub.s32 %s25, %s34
      %s45 = sor.u32 %s43, %s44
      %p46 = scmp.eq.s32.totalorder %s45, 0
      %s48 = sadd.s32 %s47, 1
      %s49 = scalar_select %p46, %s47, %s48
      %p52 = pneg %p46
      %p53 = scmp.eq.s32.totalorder %s16, 1
      %p54 = por %p52, %p53
      %p55 = scmp.ne.s32.totalorder %s47, %s50
      %p56 = scmp.eq.s32.totalorder %s16, 0
      %p57 = por %p55, %p56
      %p58 = scmp.ne.s32.totalorder %s47, %s50
      %p59 = scmp.eq.s32.totalorder %s21, 1
      %p60 = por %p58, %p59
      %p61 = scmp.ne.s32.totalorder %s50, %s51
      %p62 = scmp.eq.s32.totalorder %s21, 0
      %p63 = por %p61, %p62
      %p64 = scmp.ne.s32.totalorder %s50, %s51
      %p65 = scmp.eq.s32.totalorder %s22, 1
      %p66 = por %p64, %p65
      %p68 = scmp.ne.s32.totalorder %s51, %s67
      %p69 = scmp.eq.s32.totalorder %s22, 0
      %p70 = por %p68, %p69
      %s71 = ssub.s32 %s24, %s38
      %s72 = ssub.s32 %s25, %s34
      %s73 = sor.u32 %s71, %s72
      %p74 = scmp.eq.s32.totalorder %s73, 0
      %s76 = sadd.s32 %s75, 1
      %s77 = scalar_select %p74, %s75, %s76
      %p80 = pneg %p74
      %p81 = scmp.eq.s32.totalorder %s16, 1
      %p82 = por %p80, %p81
      %p83 = scmp.ne.s32.totalorder %s75, %s78
      %p84 = scmp.eq.s32.totalorder %s16, 0
      %p85 = por %p83, %p84
      %p86 = scmp.ne.s32.totalorder %s75, %s78
      %p87 = scmp.eq.s32.totalorder %s21, 1
      %p88 = por %p86, %p87
      %p89 = scmp.ne.s32.totalorder %s78, %s79
      %p90 = scmp.eq.s32.totalorder %s21, 0
      %p91 = por %p89, %p90
      %p92 = scmp.ne.s32.totalorder %s78, %s79
      %p93 = scmp.eq.s32.totalorder %s22, 1
      %p94 = por %p92, %p93
      %p96 = scmp.ne.s32.totalorder %s79, %s95
      %p97 = scmp.eq.s32.totalorder %s22, 0
      %p98 = por %p96, %p97
      %s99 = ssub.s32 %s24, %s38
      %p100 = scmp.eq.s32.totalorder %s99, 0
      %s102 = sadd.s32 %s101, 1
      %s103 = scalar_select %p100, %s101, %s102
      %p106 = pneg %p100
      %p107 = scmp.eq.s32.totalorder %s16, 1
      %p108 = por %p106, %p107
      %p109 = scmp.ne.s32.totalorder %s101, %s104
      %p110 = scmp.eq.s32.totalorder %s16, 0
      %p111 = por %p109, %p110
      %p112 = scmp.ne.s32.totalorder %s101, %s104
      %p113 = scmp.eq.s32.totalorder %s21, 1
      %p114 = por %p112, %p113
      %p115 = scmp.ne.s32.totalorder %s104, %s105
      %p116 = scmp.eq.s32.totalorder %s21, 0
      %p117 = por %p115, %p116
      %p118 = scmp.ne.s32.totalorder %s104, %s105
      %p119 = scmp.eq.s32.totalorder %s22, 1
      %p120 = por %p118, %p119
      %p122 = scmp.ne.s32.totalorder %s105, %s121
      %p123 = scmp.eq.s32.totalorder %s22, 0
      %p124 = por %p122, %p123
      %s125 = ssub.s32 %s23, %s42
      %s126 = ssub.s32 %s24, %s38
      %s127 = sor.u32 %s125, %s126
      %p128 = scmp.eq.s32.totalorder %s127, 0
      %s130 = sadd.s32 %s129, 1
      %s131 = scalar_select %p128, %s129, %s130
      %p134 = pneg %p128
      %p135 = scmp.eq.s32.totalorder %s16, 1
      %p136 = por %p134, %p135
      %p137 = scmp.ne.s32.totalorder %s129, %s132
      %p138 = scmp.eq.s32.totalorder %s16, 0
      %p139 = por %p137, %p138
      %p140 = scmp.ne.s32.totalorder %s129, %s132
      %p141 = scmp.eq.s32.totalorder %s21, 1
      %p142 = por %p140, %p141
      %p143 = scmp.ne.s32.totalorder %s132, %s133
      %p144 = scmp.eq.s32.totalorder %s21, 0
      %p145 = por %p143, %p144
      %p146 = scmp.ne.s32.totalorder %s132, %s133
      %p147 = scmp.eq.s32.totalorder %s22, 1
      %p148 = por %p146, %p147
      %p150 = scmp.ne.s32.totalorder %s133, %s149
      %p151 = scmp.eq.s32.totalorder %s22, 0
      %p152 = por %p150, %p151
      %p153 = scmp.le.s32.totalorder 1, %s16
      %p154 = scmp.lt.s32.totalorder %s16, 3
      %p155 = pnand %p153, %p154
      %p156 = pneg %p155
      // Predicated region
      $region9: #{tpu_custom_call.1} parent=5 // pred_check
        _
      $region10: #{tpu_custom_call.1} parent=5 // pred_check_branch
        %158 = sbr.rel (%p155) target = $region12
      $region11: #{tpu_custom_call.1} parent=5 // pred_region
        %s159 = ssub.s32 %s16, 1
        // Predicated region
        $region13: #{tpu_custom_call.1} parent=11 // pred_check
          %p160 = pneg %p91
        $region14: #{tpu_custom_call.1} parent=11 // pred_check_branch
          %162 = sbr.rel (%p160) target = $region16
        $region15: #{tpu_custom_call.1} parent=11 // pred_region
          %s163 = smul.u32 32, %s27
          %s164 = smul.u32 4, %s28
          %s166 = ssub.s32 16384, 16384
          %167 = vsyncadd [#allocation7], %s166
          %s168 = smul.addr %s163, 4
          %s169 = sadd.s32 %s164, %s168
          %s170 = smul.addr %s169, 128
          %s171 = scalar_lea.hbm %s1, %s170
          %s172 = sshll.u32 [#allocation6], 4
          %s173 = int_to_ptr.vmem [resolvable:$true] %s172
          %178 = dma.hbm_to_vmem [thread:$0]  %s171, 16384, %s173, [#allocation7], 512, 512, 32
        $region16: #{tpu_custom_call.1} parent=11 // pred_fallthru
          _
        // Predicated region
        $region17: #{tpu_custom_call.1} parent=11 // pred_check
          %p179 = pneg %p117
        $region18: #{tpu_custom_call.1} parent=11 // pred_check_branch
          %181 = sbr.rel (%p179) target = $region20
        $region19: #{tpu_custom_call.1} parent=11 // pred_region
          %s182 = smul.u32 2, %s27
          %p183 = scmp.lt.s32.totalorder %s182, 1
          %s184 = scalar_select %p183, %s182, 1
          %s185 = scalar_lea.vmem %s2, %s184
          %s186 = smul.u32 2, %s27
        $region20: #{tpu_custom_call.1} parent=11 // pred_fallthru
          _
      $region12: #{tpu_custom_call.1} parent=5 // pred_fallthru
        _
      %p187 = scmp.lt.s32.totalorder %s16, 2
      // Predicated region
      $region21: #{tpu_custom_call.1} parent=5 // pred_check
        %p188 = pneg %p187
      $region22: #{tpu_custom_call.1} parent=5 // pred_check_branch
        %190 = sbr.rel (%p188) target = $region24
      $region23: #{tpu_custom_call.1} parent=5 // pred_region
        // Predicated region
        $region25: #{tpu_custom_call.1} parent=23 // pred_check
          %p191 = pneg %p57
        $region26: #{tpu_custom_call.1} parent=23 // pred_check_branch
          %193 = sbr.rel (%p191) target = $region28
        $region27: #{tpu_custom_call.1} parent=23 // pred_region
          %s194 = sand.u32 %s47, 1
          %s195 = scalar_lea.sflag [#allocation4], %s194
          %s196 = sand.u32 %s47, 1
          %s197 = smul.addr %s196, 256
          %s198 = scalar_lea.vmem [#allocation3], %s197
          %s199 = smul.u32 8, %s23
          %s200 = smul.u32 4, %s25
          %s202 = ssub.s32 4096, 4096
          %203 = vsyncadd %s195, %s202
          %s204 = smul.addr %s199, 4
          %s205 = sadd.s32 %s200, %s204
          %s206 = smul.addr %s205, 128
          %s207 = scalar_lea.hbm %s0, %s206
          %s208 = sshll.u32 %s198, 4
          %s209 = int_to_ptr.vmem [resolvable:$true] %s208
          %214 = dma.hbm_to_vmem [thread:$0]  %s207, 4096, %s209, %s195, 512, 512, 32
        $region28: #{tpu_custom_call.1} parent=23 // pred_fallthru
          _
      $region24: #{tpu_custom_call.1} parent=5 // pred_fallthru
        _
      %p215 = scmp.le.s32.totalorder 1, %s16
      %p216 = scmp.lt.s32.totalorder %s16, 3
      %p217 = pnand %p215, %p216
      %p218 = pneg %p217
      // Predicated region
      $region29: #{tpu_custom_call.1} parent=5 // pred_check
        _
      $region30: #{tpu_custom_call.1} parent=5 // pred_check_branch
        %220 = sbr.rel (%p217) target = $region32
      $region31: #{tpu_custom_call.1} parent=5 // pred_region
        %s221 = ssub.s32 %s16, 1
        %s222 = sand.u32 %s50, 1
        %s223 = scalar_lea.sflag [#allocation4], %s222
        %s224 = sand.u32 %s50, 1
        %s225 = smul.addr %s224, 256
        %s226 = scalar_lea.vmem [#allocation3], %s225
        // Predicated region
        $region33: #{tpu_custom_call.1} parent=31 // pred_check
          %p227 = pneg %p63
        $region34: #{tpu_custom_call.1} parent=31 // pred_check_branch
          %229 = sbr.rel (%p227) target = $region36
        $region35: #{tpu_custom_call.1} parent=31 // pred_region
          %230 = dma.done %s223, 4096
        $region36: #{tpu_custom_call.1} parent=31 // pred_fallthru
          _
        // Predicated region
        $region37: #{tpu_custom_call.1} parent=31 // pred_check
          %p231 = pneg %p91
        $region38: #{tpu_custom_call.1} parent=31 // pred_check_branch
          %233 = sbr.rel (%p231) target = $region40
        $region39: #{tpu_custom_call.1} parent=31 // pred_region
          %234 = dma.done [#allocation7], 16384
        $region40: #{tpu_custom_call.1} parent=31 // pred_fallthru
          _
        %s235 = sand.u32 %s50, 1
        %s236 = scalar_lea.sflag [#allocation4], %s235
        %s237 = sand.u32 %s50, 1
        %s238 = smul.addr %s237, 256
        %s239 = scalar_lea.vmem [#allocation3], %s238
        %p240 = pneg %p63
        %p241 = pneg %p60
        %p242 = pneg %p91
        %p243 = pneg %p88
        %s244 = smul.u32 2, %s27
        %p245 = scmp.lt.s32.totalorder %s244, 1
        %s246 = scalar_select %p245, %s244, 1
        %s247 = scalar_lea.vmem %s2, %s246
        %p248 = pneg %p117
        %p249 = pneg %p114
        %p250 = pneg %p145
        %p251 = pneg %p142
        %s252 = sand.u32 %s132, 1
        %s253 = scalar_lea.sflag [#allocation5], %s252
        %s254 = sand.u32 %s132, 1
        %s255 = smul.addr %s254, 128
        %s256 = scalar_lea.vmem [#allocation8], %s255
        %s257 = smul.u32 8, %s26
        %s258 = smul.u32 4, %s28
        %s259 = smul.u32 32, %s27
        %s260 = smul.u32 4, %s28
        %s261 = smul.u32 2, %s27
        %p262 = scmp.lt.s32.totalorder %s261, 1
        %s263 = scalar_select %p262, %s261, 1
        %s264 = scalar_lea.vmem %s2, %s263
        %s265 = smul.u32 2, %s27
        %s266 = smul.u32 8, %s26
        %s267 = smul.u32 2, %s27
        %p268 = scmp.eq.s32.totalorder %s28, 0
        // Predicated region
        $region41: #{tpu_custom_call.1} parent=31 // pred_check
          %p269 = pneg %p268
        $region42: #{tpu_custom_call.1} parent=31 // pred_check_branch
          %271 = sbr.rel (%p269) target = $region44
        $region43: #{tpu_custom_call.1} parent=31 // pred_region
          %272 = vst [vmem:[#allocation2] sm:$0xff] 0.0
          %273 = vst [vmem:[#allocation2 + $0x8] sm:$0xff] 0.0
          %274 = vst [vmem:[#allocation2 + $0x10] sm:$0xff] 0.0
          %275 = vst [vmem:[#allocation2 + $0x18] sm:$0xff] 0.0
          %276 = vst [vmem:[#allocation2 + $0x20] sm:$0xff] 0.0
          %277 = vst [vmem:[#allocation2 + $0x28] sm:$0xff] 0.0
          %278 = vst [vmem:[#allocation2 + $0x30] sm:$0xff] 0.0
          %279 = vst [vmem:[#allocation2 + $0x38] sm:$0xff] 0.0
          %280 = vst [vmem:[#allocation2 + $0x40] sm:$0xff] 0.0
          %281 = vst [vmem:[#allocation2 + $0x48] sm:$0xff] 0.0
          %282 = vst [vmem:[#allocation2 + $0x50] sm:$0xff] 0.0
          %283 = vst [vmem:[#allocation2 + $0x58] sm:$0xff] 0.0
          %284 = vst [vmem:[#allocation2 + $0x60] sm:$0xff] 0.0
          %285 = vst [vmem:[#allocation2 + $0x68] sm:$0xff] 0.0
          %286 = vst [vmem:[#allocation2 + $0x70] sm:$0xff] 0.0
          %287 = vst [vmem:[#allocation2 + $0x78] sm:$0xff] 0.0
        $region44: #{tpu_custom_call.1} parent=31 // pred_fallthru
          _
        %v288 = vld [vmem:[#allocation2] sm:$0xff]
        %v289 = vld [vmem:[#allocation2 + $0x8] sm:$0xff]
        %v290 = vld [vmem:[#allocation2 + $0x10] sm:$0xff]
        %v291 = vld [vmem:[#allocation2 + $0x18] sm:$0xff]
        %v292 = vld [vmem:[#allocation2 + $0x20] sm:$0xff]
        %v293 = vld [vmem:[#allocation2 + $0x28] sm:$0xff]
        %v294 = vld [vmem:[#allocation2 + $0x30] sm:$0xff]
        %v295 = vld [vmem:[#allocation2 + $0x38] sm:$0xff]
        %v296 = vld [vmem:[#allocation2 + $0x40] sm:$0xff]
        %v297 = vld [vmem:[#allocation2 + $0x48] sm:$0xff]
        %v298 = vld [vmem:[#allocation2 + $0x50] sm:$0xff]
        %v299 = vld [vmem:[#allocation2 + $0x58] sm:$0xff]
        %v300 = vld [vmem:[#allocation2 + $0x60] sm:$0xff]
        %v301 = vld [vmem:[#allocation2 + $0x68] sm:$0xff]
        %v302 = vld [vmem:[#allocation2 + $0x70] sm:$0xff]
        %v303 = vld [vmem:[#allocation2 + $0x78] sm:$0xff]
        %v304 = vld [vmem:[%s226] sm:$0xff]
        %v305 = vld [vmem:[%s226 + $0x8] sm:$0xff]
        %v306 = vld [vmem:[%s226 + $0x10] sm:$0xff]
        %v307 = vld [vmem:[%s226 + $0x18] sm:$0xff]
        %v308 = vld [vmem:[%s226 + $0x20] sm:$0xff]
        %v309 = vld [vmem:[%s226 + $0x28] sm:$0xff]
        %v310 = vld [vmem:[%s226 + $0x30] sm:$0xff]
        %v311 = vld [vmem:[%s226 + $0x38] sm:$0xff]
        %v312 = vld [vmem:[%s226 + $0x40] sm:$0xff]
        %v313 = vld [vmem:[%s226 + $0x48] sm:$0xff]
        %v314 = vld [vmem:[%s226 + $0x50] sm:$0xff]
        %v315 = vld [vmem:[%s226 + $0x58] sm:$0xff]
        %v316 = vld [vmem:[%s226 + $0x60] sm:$0xff]
        %v317 = vld [vmem:[%s226 + $0x68] sm:$0xff]
        %v318 = vld [vmem:[%s226 + $0x70] sm:$0xff]
        %v319 = vld [vmem:[%s226 + $0x78] sm:$0xff]
        %v320 = vld [vmem:[%s226 + $0x80] sm:$0xff]
        %v321 = vld [vmem:[%s226 + $0x88] sm:$0xff]
        %v322 = vld [vmem:[%s226 + $0x90] sm:$0xff]
        %v323 = vld [vmem:[%s226 + $0x98] sm:$0xff]
        %v324 = vld [vmem:[%s226 + $0xa0] sm:$0xff]
        %v325 = vld [vmem:[%s226 + $0xa8] sm:$0xff]
        %v326 = vld [vmem:[%s226 + $0xb0] sm:$0xff]
        %v327 = vld [vmem:[%s226 + $0xb8] sm:$0xff]
        %v328 = vld [vmem:[%s226 + $0xc0] sm:$0xff]
        %v329 = vld [vmem:[%s226 + $0xc8] sm:$0xff]
        %v330 = vld [vmem:[%s226 + $0xd0] sm:$0xff]
        %v331 = vld [vmem:[%s226 + $0xd8] sm:$0xff]
        %v332 = vld [vmem:[%s226 + $0xe0] sm:$0xff]
        %v333 = vld [vmem:[%s226 + $0xe8] sm:$0xff]
        %v334 = vld [vmem:[%s226 + $0xf0] sm:$0xff]
        %v335 = vld [vmem:[%s226 + $0xf8] sm:$0xff]
        %v336 = vld [vmem:[#allocation6] sm:$0xff]
        %v337 = vld [vmem:[#allocation6 + $0x8] sm:$0xff]
        %v338 = vld [vmem:[#allocation6 + $0x10] sm:$0xff]
        %v339 = vld [vmem:[#allocation6 + $0x18] sm:$0xff]
        %v340 = vld [vmem:[#allocation6 + $0x20] sm:$0xff]
        %v341 = vld [vmem:[#allocation6 + $0x28] sm:$0xff]
        %v342 = vld [vmem:[#allocation6 + $0x30] sm:$0xff]
        %v343 = vld [vmem:[#allocation6 + $0x38] sm:$0xff]
        %v344 = vld [vmem:[#allocation6 + $0x40] sm:$0xff]
        %v345 = vld [vmem:[#allocation6 + $0x48] sm:$0xff]
        %v346 = vld [vmem:[#allocation6 + $0x50] sm:$0xff]
        %v347 = vld [vmem:[#allocation6 + $0x58] sm:$0xff]
        %v348 = vld [vmem:[#allocation6 + $0x60] sm:$0xff]
        %v349 = vld [vmem:[#allocation6 + $0x68] sm:$0xff]
        %v350 = vld [vmem:[#allocation6 + $0x70] sm:$0xff]
        %v351 = vld [vmem:[#allocation6 + $0x78] sm:$0xff]
        %v352 = vld [vmem:[#allocation6 + $0x80] sm:$0xff]
        %v353 = vld [vmem:[#allocation6 + $0x88] sm:$0xff]
        %v354 = vld [vmem:[#allocation6 + $0x90] sm:$0xff]
        %v355 = vld [vmem:[#allocation6 + $0x98] sm:$0xff]
        %v356 = vld [vmem:[#allocation6 + $0xa0] sm:$0xff]
        %v357 = vld [vmem:[#allocation6 + $0xa8] sm:$0xff]
        %v358 = vld [vmem:[#allocation6 + $0xb0] sm:$0xff]
        %v359 = vld [vmem:[#allocation6 + $0xb8] sm:$0xff]
        %v360 = vld [vmem:[#allocation6 + $0xc0] sm:$0xff]
        %v361 = vld [vmem:[#allocation6 + $0xc8] sm:$0xff]
        %v362 = vld [vmem:[#allocation6 + $0xd0] sm:$0xff]
        %v363 = vld [vmem:[#allocation6 + $0xd8] sm:$0xff]
        %v364 = vld [vmem:[#allocation6 + $0xe0] sm:$0xff]
        %v365 = vld [vmem:[#allocation6 + $0xe8] sm:$0xff]
        %v366 = vld [vmem:[#allocation6 + $0xf0] sm:$0xff]
        %v367 = vld [vmem:[#allocation6 + $0xf8] sm:$0xff]
        %v368 = vld [vmem:[#allocation6 + $0x100] sm:$0xff]
        %v369 = vld [vmem:[#allocation6 + $0x108] sm:$0xff]
        %v370 = vld [vmem:[#allocation6 + $0x110] sm:$0xff]
        %v371 = vld [vmem:[#allocation6 + $0x118] sm:$0xff]
        %v372 = vld [vmem:[#allocation6 + $0x120] sm:$0xff]
        %v373 = vld [vmem:[#allocation6 + $0x128] sm:$0xff]
        %v374 = vld [vmem:[#allocation6 + $0x130] sm:$0xff]
        %v375 = vld [vmem:[#allocation6 + $0x138] sm:$0xff]
        %v376 = vld [vmem:[#allocation6 + $0x140] sm:$0xff]
        %v377 = vld [vmem:[#allocation6 + $0x148] sm:$0xff]
        %v378 = vld [vmem:[#allocation6 + $0x150] sm:$0xff]
        %v379 = vld [vmem:[#allocation6 + $0x158] sm:$0xff]
        %v380 = vld [vmem:[#allocation6 + $0x160] sm:$0xff]
        %v381 = vld [vmem:[#allocation6 + $0x168] sm:$0xff]
        %v382 = vld [vmem:[#allocation6 + $0x170] sm:$0xff]
        %v383 = vld [vmem:[#allocation6 + $0x178] sm:$0xff]
        %v384 = vld [vmem:[#allocation6 + $0x180] sm:$0xff]
        %v385 = vld [vmem:[#allocation6 + $0x188] sm:$0xff]
        %v386 = vld [vmem:[#allocation6 + $0x190] sm:$0xff]
        %v387 = vld [vmem:[#allocation6 + $0x198] sm:$0xff]
        %v388 = vld [vmem:[#allocation6 + $0x1a0] sm:$0xff]
        %v389 = vld [vmem:[#allocation6 + $0x1a8] sm:$0xff]
        %v390 = vld [vmem:[#allocation6 + $0x1b0] sm:$0xff]
        %v391 = vld [vmem:[#allocation6 + $0x1b8] sm:$0xff]
        %v392 = vld [vmem:[#allocation6 + $0x1c0] sm:$0xff]
        %v393 = vld [vmem:[#allocation6 + $0x1c8] sm:$0xff]
        %v394 = vld [vmem:[#allocation6 + $0x1d0] sm:$0xff]
        %v395 = vld [vmem:[#allocation6 + $0x1d8] sm:$0xff]
        %v396 = vld [vmem:[#allocation6 + $0x1e0] sm:$0xff]
        %v397 = vld [vmem:[#allocation6 + $0x1e8] sm:$0xff]
        %v398 = vld [vmem:[#allocation6 + $0x1f0] sm:$0xff]
        %v399 = vld [vmem:[#allocation6 + $0x1f8] sm:$0xff]
        %v400 = vld [vmem:[#allocation6 + $0x200] sm:$0xff]
        %v401 = vld [vmem:[#allocation6 + $0x208] sm:$0xff]
        %v402 = vld [vmem:[#allocation6 + $0x210] sm:$0xff]
        %v403 = vld [vmem:[#allocation6 + $0x218] sm:$0xff]
        %v404 = vld [vmem:[#allocation6 + $0x220] sm:$0xff]
        %v405 = vld [vmem:[#allocation6 + $0x228] sm:$0xff]
        %v406 = vld [vmem:[#allocation6 + $0x230] sm:$0xff]
        %v407 = vld [vmem:[#allocation6 + $0x238] sm:$0xff]
        %v408 = vld [vmem:[#allocation6 + $0x240] sm:$0xff]
        %v409 = vld [vmem:[#allocation6 + $0x248] sm:$0xff]
        %v410 = vld [vmem:[#allocation6 + $0x250] sm:$0xff]
        %v411 = vld [vmem:[#allocation6 + $0x258] sm:$0xff]
        %v412 = vld [vmem:[#allocation6 + $0x260] sm:$0xff]
        %v413 = vld [vmem:[#allocation6 + $0x268] sm:$0xff]
        %v414 = vld [vmem:[#allocation6 + $0x270] sm:$0xff]
        %v415 = vld [vmem:[#allocation6 + $0x278] sm:$0xff]
        %v416 = vld [vmem:[#allocation6 + $0x280] sm:$0xff]
        %v417 = vld [vmem:[#allocation6 + $0x288] sm:$0xff]
        %v418 = vld [vmem:[#allocation6 + $0x290] sm:$0xff]
        %v419 = vld [vmem:[#allocation6 + $0x298] sm:$0xff]
        %v420 = vld [vmem:[#allocation6 + $0x2a0] sm:$0xff]
        %v421 = vld [vmem:[#allocation6 + $0x2a8] sm:$0xff]
        %v422 = vld [vmem:[#allocation6 + $0x2b0] sm:$0xff]
        %v423 = vld [vmem:[#allocation6 + $0x2b8] sm:$0xff]
        %v424 = vld [vmem:[#allocation6 + $0x2c0] sm:$0xff]
        %v425 = vld [vmem:[#allocation6 + $0x2c8] sm:$0xff]
        %v426 = vld [vmem:[#allocation6 + $0x2d0] sm:$0xff]
        %v427 = vld [vmem:[#allocation6 + $0x2d8] sm:$0xff]
        %v428 = vld [vmem:[#allocation6 + $0x2e0] sm:$0xff]
        %v429 = vld [vmem:[#allocation6 + $0x2e8] sm:$0xff]
        %v430 = vld [vmem:[#allocation6 + $0x2f0] sm:$0xff]
        %v431 = vld [vmem:[#allocation6 + $0x2f8] sm:$0xff]
        %v432 = vld [vmem:[#allocation6 + $0x300] sm:$0xff]
        %v433 = vld [vmem:[#allocation6 + $0x308] sm:$0xff]
        %v434 = vld [vmem:[#allocation6 + $0x310] sm:$0xff]
        %v435 = vld [vmem:[#allocation6 + $0x318] sm:$0xff]
        %v436 = vld [vmem:[#allocation6 + $0x320] sm:$0xff]
        %v437 = vld [vmem:[#allocation6 + $0x328] sm:$0xff]
        %v438 = vld [vmem:[#allocation6 + $0x330] sm:$0xff]
        %v439 = vld [vmem:[#allocation6 + $0x338] sm:$0xff]
        %v440 = vld [vmem:[#allocation6 + $0x340] sm:$0xff]
        %v441 = vld [vmem:[#allocation6 + $0x348] sm:$0xff]
        %v442 = vld [vmem:[#allocation6 + $0x350] sm:$0xff]
        %v443 = vld [vmem:[#allocation6 + $0x358] sm:$0xff]
        %v444 = vld [vmem:[#allocation6 + $0x360] sm:$0xff]
        %v445 = vld [vmem:[#allocation6 + $0x368] sm:$0xff]
        %v446 = vld [vmem:[#allocation6 + $0x370] sm:$0xff]
        %v447 = vld [vmem:[#allocation6 + $0x378] sm:$0xff]
        %v448 = vld [vmem:[#allocation6 + $0x380] sm:$0xff]
        %v449 = vld [vmem:[#allocation6 + $0x388] sm:$0xff]
        %v450 = vld [vmem:[#allocation6 + $0x390] sm:$0xff]
        %v451 = vld [vmem:[#allocation6 + $0x398] sm:$0xff]
        %v452 = vld [vmem:[#allocation6 + $0x3a0] sm:$0xff]
        %v453 = vld [vmem:[#allocation6 + $0x3a8] sm:$0xff]
        %v454 = vld [vmem:[#allocation6 + $0x3b0] sm:$0xff]
        %v455 = vld [vmem:[#allocation6 + $0x3b8] sm:$0xff]
        %v456 = vld [vmem:[#allocation6 + $0x3c0] sm:$0xff]
        %v457 = vld [vmem:[#allocation6 + $0x3c8] sm:$0xff]
        %v458 = vld [vmem:[#allocation6 + $0x3d0] sm:$0xff]
        %v459 = vld [vmem:[#allocation6 + $0x3d8] sm:$0xff]
        %v460 = vld [vmem:[#allocation6 + $0x3e0] sm:$0xff]
        %v461 = vld [vmem:[#allocation6 + $0x3e8] sm:$0xff]
        %v462 = vld [vmem:[#allocation6 + $0x3f0] sm:$0xff]
        %v463 = vld [vmem:[#allocation6 + $0x3f8] sm:$0xff]
        %464 = vmatprep.subr.mxu0 %v337
        %465 = vmatpush1.xpose.msra.mxu0 %v336
        %466 = vmatprep.subr.mxu0 %v341
        %467 = vmatpush1.xpose.msra.mxu0 %v340
        %468 = vmatprep.subr.mxu0 %v345
        %469 = vmatpush1.xpose.msra.mxu0 %v344
        %470 = vmatprep.subr.mxu0 %v349
        %471 = vmatpush1.xpose.msra.mxu0 %v348
        %472 = vmatprep.subr.mxu0 %v353
        %473 = vmatpush1.xpose.msra.mxu0 %v352
        %474 = vmatprep.subr.mxu0 %v357
        %475 = vmatpush1.xpose.msra.mxu0 %v356
        %476 = vmatprep.subr.mxu0 %v361
        %477 = vmatpush1.xpose.msra.mxu0 %v360
        %478 = vmatprep.subr.mxu0 %v365
        %479 = vmatpush1.xpose.msra.mxu0 %v364
        %480 = vmatprep.subr.mxu0 %v369
        %481 = vmatpush1.xpose.msra.mxu0 %v368
        %482 = vmatprep.subr.mxu0 %v373
        %483 = vmatpush1.xpose.msra.mxu0 %v372
        %484 = vmatprep.subr.mxu0 %v377
        %485 = vmatpush1.xpose.msra.mxu0 %v376
        %486 = vmatprep.subr.mxu0 %v381
        %487 = vmatpush1.xpose.msra.mxu0 %v380
        %488 = vmatprep.subr.mxu0 %v385
        %489 = vmatpush1.xpose.msra.mxu0 %v384
        %490 = vmatprep.subr.mxu0 %v389
        %491 = vmatpush1.xpose.msra.mxu0 %v388
        %492 = vmatprep.subr.mxu0 %v393
        %493 = vmatpush1.xpose.msra.mxu0 %v392
        %494 = vmatprep.subr.mxu0 %v397
        %495 = vmatpush1.xpose.msra.mxu0 %v396
        %496 = vmatprep.subr.mxu0 %v401
        %497 = vmatpush1.xpose.msra.mxu0 %v400
        %498 = vmatprep.subr.mxu0 %v405
        %499 = vmatpush1.xpose.msra.mxu0 %v404
        %500 = vmatprep.subr.mxu0 %v409
        %501 = vmatpush1.xpose.msra.mxu0 %v408
        %502 = vmatprep.subr.mxu0 %v413
        %503 = vmatpush1.xpose.msra.mxu0 %v412
        %504 = vmatprep.subr.mxu0 %v417
        %505 = vmatpush1.xpose.msra.mxu0 %v416
        %506 = vmatprep.subr.mxu0 %v421
        %507 = vmatpush1.xpose.msra.mxu0 %v420
        %508 = vmatprep.subr.mxu0 %v425
        %509 = vmatpush1.xpose.msra.mxu0 %v424
        %510 = vmatprep.subr.mxu0 %v429
        %511 = vmatpush1.xpose.msra.mxu0 %v428
        %512 = vmatprep.subr.mxu0 %v433
        %513 = vmatpush1.xpose.msra.mxu0 %v432
        %514 = vmatprep.subr.mxu0 %v437
        %515 = vmatpush1.xpose.msra.mxu0 %v436
        %516 = vmatprep.subr.mxu0 %v441
        %517 = vmatpush1.xpose.msra.mxu0 %v440
        %518 = vmatprep.subr.mxu0 %v445
        %519 = vmatpush1.xpose.msra.mxu0 %v444
        %520 = vmatprep.subr.mxu0 %v449
        %521 = vmatpush1.xpose.msra.mxu0 %v448
        %522 = vmatprep.subr.mxu0 %v453
        %523 = vmatpush1.xpose.msra.mxu0 %v452
        %524 = vmatprep.subr.mxu0 %v457
        %525 = vmatpush1.xpose.msra.mxu0 %v456
        %526 = vmatprep.subr.mxu0 %v461
        %527 = vmatpush1.xpose.msra.mxu0 %v460
        %528 = vmatprep.mubr.f32.mxu0 %v305
        %529 = vmatmul.mubr.f32.gmra.mrb[0].mxu0 %v304
        %v530 = vpop.f32.mrb[0].mxu0
        %v531 = vadd.f32 0.0, %v530
        %v532 = vpop.f32.mrb[0].mxu0
        %v533 = vadd.f32 0.0, %v532
        %534 = vmatprep.mubr.f32.mxu0 %v309
        %535 = vmatmul.mubr.f32.gmra.mrb[0].mxu0 %v308
        %v536 = vpop.f32.mrb[0].mxu0
        %v537 = vadd.f32 0.0, %v536
        %v538 = vpop.f32.mrb[0].mxu0
        %v539 = vadd.f32 0.0, %v538
        %540 = vmatprep.mubr.f32.mxu0 %v313
        %541 = vmatmul.mubr.f32.gmra.mrb[0].mxu0 %v312
        %v542 = vpop.f32.mrb[0].mxu0
        %v543 = vadd.f32 0.0, %v542
        %v544 = vpop.f32.mrb[0].mxu0
        %v545 = vadd.f32 0.0, %v544
        %546 = vmatprep.mubr.f32.mxu0 %v317
        %547 = vmatmul.mubr.f32.gmra.mrb[0].mxu0 %v316
        %v548 = vpop.f32.mrb[0].mxu0
        %v549 = vadd.f32 0.0, %v548
        %v550 = vpop.f32.mrb[0].mxu0
        %v551 = vadd.f32 0.0, %v550
        %552 = vmatprep.mubr.f32.mxu0 %v321
        %553 = vmatmul.mubr.f32.gmra.mrb[0].mxu0 %v320
        %v554 = vpop.f32.mrb[0].mxu0
        %v555 = vadd.f32 0.0, %v554
        %v556 = vpop.f32.mrb[0].mxu0
        %v557 = vadd.f32 0.0, %v556
        %558 = vmatprep.mubr.f32.mxu0 %v325
        %559 = vmatmul.mubr.f32.gmra.mrb[0].mxu0 %v324
        %v560 = vpop.f32.mrb[0].mxu0
        %v561 = vadd.f32 0.0, %v560
        %v562 = vpop.f32.mrb[0].mxu0
        %v563 = vadd.f32 0.0, %v562
        %564 = vmatprep.mubr.f32.mxu0 %v329
        %565 = vmatmul.mubr.f32.gmra.mrb[0].mxu0 %v328
        %v566 = vpop.f32.mrb[0].mxu0
        %v567 = vadd.f32 0.0, %v566
        %v568 = vpop.f32.mrb[0].mxu0
        %v569 = vadd.f32 0.0, %v568
        %570 = vmatprep.mubr.f32.mxu0 %v333
        %571 = vmatmul.mubr.f32.gmra.mrb[0].mxu0 %v332
        %v572 = vpop.f32.mrb[0].mxu0
        %v573 = vadd.f32 0.0, %v572
        %v574 = vpop.f32.mrb[0].mxu0
        %v575 = vadd.f32 0.0, %v574
        %576 = vdwg.mxu0
        %577 = vmatprep.subr.mxu0 %v339
        %578 = vmatpush1.xpose.msra.mxu0 %v338
        %579 = vmatprep.subr.mxu0 %v343
        %580 = vmatpush1.xpose.msra.mxu0 %v342
        %581 = vmatprep.subr.mxu0 %v347
        %582 = vmatpush1.xpose.msra.mxu0 %v346
        %583 = vmatprep.subr.mxu0 %v351
        %584 = vmatpush1.xpose.msra.mxu0 %v350
        %585 = vmatprep.subr.mxu0 %v355
        %586 = vmatpush1.xpose.msra.mxu0 %v354
        %587 = vmatprep.subr.mxu0 %v359
        %588 = vmatpush1.xpose.msra.mxu0 %v358
        %589 = vmatprep.subr.mxu0 %v363
        %590 = vmatpush1.xpose.msra.mxu0 %v362
        %591 = vmatprep.subr.mxu0 %v367
        %592 = vmatpush1.xpose.msra.mxu0 %v366
        %593 = vmatprep.subr.mxu0 %v371
        %594 = vmatpush1.xpose.msra.mxu0 %v370
        %595 = vmatprep.subr.mxu0 %v375
        %596 = vmatpush1.xpose.msra.mxu0 %v374
        %597 = vmatprep.subr.mxu0 %v379
        %598 = vmatpush1.xpose.msra.mxu0 %v378
        %599 = vmatprep.subr.mxu0 %v383
        %600 = vmatpush1.xpose.msra.mxu0 %v382
        %601 = vmatprep.subr.mxu0 %v387
        %602 = vmatpush1.xpose.msra.mxu0 %v386
        %603 = vmatprep.subr.mxu0 %v391
        %604 = vmatpush1.xpose.msra.mxu0 %v390
        %605 = vmatprep.subr.mxu0 %v395
        %606 = vmatpush1.xpose.msra.mxu0 %v394
        %607 = vmatprep.subr.mxu0 %v399
        %608 = vmatpush1.xpose.msra.mxu0 %v398
        %609 = vmatprep.subr.mxu0 %v403
        %610 = vmatpush1.xpose.msra.mxu0 %v402
        %611 = vmatprep.subr.mxu0 %v407
        %612 = vmatpush1.xpose.msra.mxu0 %v406
        %613 = vmatprep.subr.mxu0 %v411
        %614 = vmatpush1.xpose.msra.mxu0 %v410
        %615 = vmatprep.subr.mxu0 %v415
        %616 = vmatpush1.xpose.msra.mxu0 %v414
        %617 = vmatprep.subr.mxu0 %v419
        %618 = vmatpush1.xpose.msra.mxu0 %v418
        %619 = vmatprep.subr.mxu0 %v423
        %620 = vmatpush1.xpose.msra.mxu0 %v422
        %621 = vmatprep.subr.mxu0 %v427
        %622 = vmatpush1.xpose.msra.mxu0 %v426
        %623 = vmatprep.subr.mxu0 %v431
        %624 = vmatpush1.xpose.msra.mxu0 %v430
        %625 = vmatprep.subr.mxu0 %v435
        %626 = vmatpush1.xpose.msra.mxu0 %v434
        %627 = vmatprep.subr.mxu0 %v439
        %628 = vmatpush1.xpose.msra.mxu0 %v438
        %629 = vmatprep.subr.mxu0 %v443
        %630 = vmatpush1.xpose.msra.mxu0 %v442
        %631 = vmatprep.subr.mxu0 %v447
        %632 = vmatpush1.xpose.msra.mxu0 %v446
        %633 = vmatprep.subr.mxu0 %v451
        %634 = vmatpush1.xpose.msra.mxu0 %v450
        %635 = vmatprep.subr.mxu0 %v455
        %636 = vmatpush1.xpose.msra.mxu0 %v454
        %637 = vmatprep.subr.mxu0 %v459
        %638 = vmatpush1.xpose.msra.mxu0 %v458
        %639 = vmatprep.subr.mxu0 %v463
        %640 = vmatpush1.xpose.msra.mxu0 %v462
        %641 = vmatprep.mubr.f32.mxu0 %v307
        %642 = vmatmul.mubr.f32.gmra.mrb[0].mxu0 %v306
        %v643 = vpop.f32.mrb[0].mxu0
        %v644 = vadd.f32 %v531, %v643
        %v645 = vpop.f32.mrb[0].mxu0
        %v646 = vadd.f32 %v533, %v645
        %647 = vmatprep.mubr.f32.mxu0 %v311
        %648 = vmatmul.mubr.f32.gmra.mrb[0].mxu0 %v310
        %v649 = vpop.f32.mrb[0].mxu0
        %v650 = vadd.f32 %v537, %v649
        %v651 = vpop.f32.mrb[0].mxu0
        %v652 = vadd.f32 %v539, %v651
        %653 = vmatprep.mubr.f32.mxu0 %v315
        %654 = vmatmul.mubr.f32.gmra.mrb[0].mxu0 %v314
        %v655 = vpop.f32.mrb[0].mxu0
        %v656 = vadd.f32 %v543, %v655
        %v657 = vpop.f32.mrb[0].mxu0
        %v658 = vadd.f32 %v545, %v657
        %659 = vmatprep.mubr.f32.mxu0 %v319
        %660 = vmatmul.mubr.f32.gmra.mrb[0].mxu0 %v318
        %v661 = vpop.f32.mrb[0].mxu0
        %v662 = vadd.f32 %v549, %v661
        %v663 = vpop.f32.mrb[0].mxu0
        %v664 = vadd.f32 %v551, %v663
        %665 = vmatprep.mubr.f32.mxu0 %v323
        %666 = vmatmul.mubr.f32.gmra.mrb[0].mxu0 %v322
        %v667 = vpop.f32.mrb[0].mxu0
        %v668 = vadd.f32 %v555, %v667
        %v669 = vpop.f32.mrb[0].mxu0
        %v670 = vadd.f32 %v557, %v669
        %671 = vmatprep.mubr.f32.mxu0 %v327
        %672 = vmatmul.mubr.f32.gmra.mrb[0].mxu0 %v326
        %v673 = vpop.f32.mrb[0].mxu0
        %v674 = vadd.f32 %v561, %v673
        %v675 = vpop.f32.mrb[0].mxu0
        %v676 = vadd.f32 %v563, %v675
        %677 = vmatprep.mubr.f32.mxu0 %v331
        %678 = vmatmul.mubr.f32.gmra.mrb[0].mxu0 %v330
        %v679 = vpop.f32.mrb[0].mxu0
        %v680 = vadd.f32 %v567, %v679
        %v681 = vpop.f32.mrb[0].mxu0
        %v682 = vadd.f32 %v569, %v681
        %683 = vmatprep.mubr.f32.mxu0 %v335
        %684 = vmatmul.mubr.f32.gmra.mrb[0].mxu0 %v334
        %v685 = vpop.f32.mrb[0].mxu0
        %v686 = vadd.f32 %v573, %v685
        %v687 = vpop.f32.mrb[0].mxu0
        %v688 = vadd.f32 %v575, %v687
        %689 = vdwg.mxu0
        %v690 = vadd.f32 %v288, %v644
        %v691 = vadd.f32 %v289, %v646
        %v692 = vadd.f32 %v290, %v650
        %v693 = vadd.f32 %v291, %v652
        %v694 = vadd.f32 %v292, %v656
        %v695 = vadd.f32 %v293, %v658
        %v696 = vadd.f32 %v294, %v662
        %v697 = vadd.f32 %v295, %v664
        %v698 = vadd.f32 %v296, %v668
        %v699 = vadd.f32 %v297, %v670
        %v700 = vadd.f32 %v298, %v674
        %v701 = vadd.f32 %v299, %v676
        %v702 = vadd.f32 %v300, %v680
        %v703 = vadd.f32 %v301, %v682
        %v704 = vadd.f32 %v302, %v686
        %v705 = vadd.f32 %v303, %v688
        %706 = vst [vmem:[#allocation2] sm:$0xff] %v690
        %707 = vst [vmem:[#allocation2 + $0x8] sm:$0xff] %v691
        %708 = vst [vmem:[#allocation2 + $0x10] sm:$0xff] %v692
        %709 = vst [vmem:[#allocation2 + $0x18] sm:$0xff] %v693
        %710 = vst [vmem:[#allocation2 + $0x20] sm:$0xff] %v694
        %711 = vst [vmem:[#allocation2 + $0x28] sm:$0xff] %v695
        %712 = vst [vmem:[#allocation2 + $0x30] sm:$0xff] %v696
        %713 = vst [vmem:[#allocation2 + $0x38] sm:$0xff] %v697
        %714 = vst [vmem:[#allocation2 + $0x40] sm:$0xff] %v698
        %715 = vst [vmem:[#allocation2 + $0x48] sm:$0xff] %v699
        %716 = vst [vmem:[#allocation2 + $0x50] sm:$0xff] %v700
        %717 = vst [vmem:[#allocation2 + $0x58] sm:$0xff] %v701
        %718 = vst [vmem:[#allocation2 + $0x60] sm:$0xff] %v702
        %719 = vst [vmem:[#allocation2 + $0x68] sm:$0xff] %v703
        %720 = vst [vmem:[#allocation2 + $0x70] sm:$0xff] %v704
        %721 = vst [vmem:[#allocation2 + $0x78] sm:$0xff] %v705
        // Predicated region
        $region45: #{tpu_custom_call.1} parent=31 // pred_check
          %p722 = pneg %p268
        $region46: #{tpu_custom_call.1} parent=31 // pred_check_branch
          %724 = sbr.rel (%p722) target = $region48
        $region47: #{tpu_custom_call.1} parent=31 // pred_region
          %v725 = vld [vmem:[#allocation2] sm:$0xff]
          %v726 = vld [vmem:[#allocation2 + $0x8] sm:$0xff]
          %v727 = vld [vmem:[#allocation2 + $0x10] sm:$0xff]
          %v728 = vld [vmem:[#allocation2 + $0x18] sm:$0xff]
          %v729 = vld [vmem:[#allocation2 + $0x20] sm:$0xff]
          %v730 = vld [vmem:[#allocation2 + $0x28] sm:$0xff]
          %v731 = vld [vmem:[#allocation2 + $0x30] sm:$0xff]
          %v732 = vld [vmem:[#allocation2 + $0x38] sm:$0xff]
          %v733 = vld [vmem:[#allocation2 + $0x40] sm:$0xff]
          %v734 = vld [vmem:[#allocation2 + $0x48] sm:$0xff]
          %v735 = vld [vmem:[#allocation2 + $0x50] sm:$0xff]
          %v736 = vld [vmem:[#allocation2 + $0x58] sm:$0xff]
          %v737 = vld [vmem:[#allocation2 + $0x60] sm:$0xff]
          %v738 = vld [vmem:[#allocation2 + $0x68] sm:$0xff]
          %v739 = vld [vmem:[#allocation2 + $0x70] sm:$0xff]
          %v740 = vld [vmem:[#allocation2 + $0x78] sm:$0xff]
          %v741 = vld [vmem:[%s264] sm:$0x3]
          %v743 = vlaneseq
          %v744 = vshrl.u32 %v743, 7
          %v745 = vsub.s32 0, %v744
          %v746 = vrot.slane %v741, %v745
          %v747 = vlaneseq
          %v748 = vshrl.u32 %v747, 7
          %v749 = vsub.s32 1, %v748
          %v750 = vrot.slane %v741, %v749
          %v753 = vadd.f32 %v725, %v746
          %v754 = vadd.f32 %v726, %v750
          %v755 = vadd.f32 %v727, %v746
          %v756 = vadd.f32 %v728, %v750
          %v757 = vadd.f32 %v729, %v746
          %v758 = vadd.f32 %v730, %v750
          %v759 = vadd.f32 %v731, %v746
          %v760 = vadd.f32 %v732, %v750
          %v761 = vadd.f32 %v733, %v746
          %v762 = vadd.f32 %v734, %v750
          %v763 = vadd.f32 %v735, %v746
          %v764 = vadd.f32 %v736, %v750
          %v765 = vadd.f32 %v737, %v746
          %v766 = vadd.f32 %v738, %v750
          %v767 = vadd.f32 %v739, %v746
          %v768 = vadd.f32 %v740, %v750
          %769 = vst [vmem:[%s256] sm:$0xff] %v753
          %770 = vst [vmem:[%s256 + $0x8] sm:$0xff] %v754
          %771 = vst [vmem:[%s256 + $0x10] sm:$0xff] %v755
          %772 = vst [vmem:[%s256 + $0x18] sm:$0xff] %v756
          %773 = vst [vmem:[%s256 + $0x20] sm:$0xff] %v757
          %774 = vst [vmem:[%s256 + $0x28] sm:$0xff] %v758
          %775 = vst [vmem:[%s256 + $0x30] sm:$0xff] %v759
          %776 = vst [vmem:[%s256 + $0x38] sm:$0xff] %v760
          %777 = vst [vmem:[%s256 + $0x40] sm:$0xff] %v761
          %778 = vst [vmem:[%s256 + $0x48] sm:$0xff] %v762
          %779 = vst [vmem:[%s256 + $0x50] sm:$0xff] %v763
          %780 = vst [vmem:[%s256 + $0x58] sm:$0xff] %v764
          %781 = vst [vmem:[%s256 + $0x60] sm:$0xff] %v765
          %782 = vst [vmem:[%s256 + $0x68] sm:$0xff] %v766
          %783 = vst [vmem:[%s256 + $0x70] sm:$0xff] %v767
          %784 = vst [vmem:[%s256 + $0x78] sm:$0xff] %v768
        $region48: #{tpu_custom_call.1} parent=31 // pred_fallthru
          _
        %s785 = sand.u32 %s132, 1
        %s786 = scalar_lea.sflag [#allocation5], %s785
        %s787 = sand.u32 %s132, 1
        %s788 = smul.addr %s787, 128
        %s789 = scalar_lea.vmem [#allocation8], %s788
        // Predicated region
        $region49: #{tpu_custom_call.1} parent=31 // pred_check
          %p790 = pneg %p142
        $region50: #{tpu_custom_call.1} parent=31 // pred_check_branch
          %792 = sbr.rel (%p790) target = $region52
        $region51: #{tpu_custom_call.1} parent=31 // pred_region
          %s793 = smul.u32 8, %s26
          %s794 = smul.u32 2, %s27
          %s796 = ssub.s32 2048, 2048
          %797 = vsyncadd %s786, %s796
          %s798 = smul.addr %s793, 2
          %s799 = sadd.s32 %s794, %s798
          %s800 = smul.addr %s799, 128
          %s801 = scalar_lea.hbm %s3, %s800
          %s802 = sshll.u32 %s789, 4
          %s803 = int_to_ptr.vmem [resolvable:$true] %s802
          %808 = dma.vmem_to_hbm [thread:$0]  %s803, 2048, %s801, %s786, 256, 256, 16
        $region52: #{tpu_custom_call.1} parent=31 // pred_fallthru
          _
      $region32: #{tpu_custom_call.1} parent=5 // pred_fallthru
        _
      %p809 = scmp.le.s32.totalorder 2, %s16
      // Predicated region
      $region53: #{tpu_custom_call.1} parent=5 // pred_check
        %p810 = pneg %p809
      $region54: #{tpu_custom_call.1} parent=5 // pred_check_branch
        %812 = sbr.rel (%p810) target = $region56
      $region55: #{tpu_custom_call.1} parent=5 // pred_region
        %s813 = ssub.s32 %s16, 2
        // Predicated region
        $region57: #{tpu_custom_call.1} parent=55 // pred_check
          %p814 = pneg %p148
        $region58: #{tpu_custom_call.1} parent=55 // pred_check_branch
          %816 = sbr.rel (%p814) target = $region60
        $region59: #{tpu_custom_call.1} parent=55 // pred_region
          %s817 = sand.u32 %s133, 1
          %s818 = scalar_lea.sflag [#allocation5], %s817
          %s819 = sand.u32 %s133, 1
          %s820 = smul.addr %s819, 128
          %s821 = scalar_lea.vmem [#allocation8], %s820
          %822 = dma.done %s818, 2048
        $region60: #{tpu_custom_call.1} parent=55 // pred_fallthru
          _
      $region56: #{tpu_custom_call.1} parent=5 // pred_fallthru
        _
    $region6: #{tpu_custom_call.1} parent=1 // loop_footer
      %s20 = sadd.s32 1, %s16
    $region7: #{tpu_custom_call.1} parent=1 // loop_footer_branch
      %15 = sbr.rel target = $region3
    $region8: #{tpu_custom_call.1} parent=1 // loop_exit
      _
    %823 = vsyncpa [#allocation4], 1
    %s824 = scalar_lea.sflag [#allocation4], 1
    %825 = vsyncpa %s824, 1
    %826 = vsyncpa [#allocation7], 1
    %827 = vsyncpa [#allocation5], 1
    %s828 = scalar_lea.sflag [#allocation5], 1
    %829 = vsyncpa %s828, 1

</llo_original>
